<compile_context>
chip_gen: v6e
topology: v6e:2x2x1
jax: 0.10.0
libtpu: 0.0.40
codegen_flags: <defaults>
</compile_context>

<pallas_src>
import jax
import jax.numpy as jnp
from jax.experimental import pallas as pl
from jax.experimental.pallas import tpu as pltpu

_LANE = 128      # vreg lane width
_SUBLANE = 8     # vreg sublane count (f32)


def _swish_kernel(x_ref, o_ref):
    x = x_ref[...].astype(jnp.float32)
    # sigmoid(x) == 0.5 * (tanh(x/2) + 1): one EUP op, no divide, no inf.
    sig = 0.5 * (jnp.tanh(0.5 * x) + 1.0)
    o_ref[...] = (x * sig).astype(o_ref.dtype)


def swish(x, *, lanes=512, block_rows=256):
    """Elementwise Swish for any-shaped array via a lane-dense Pallas kernel."""
    orig_shape = x.shape
    dtype = x.dtype
    n = x.size
    if n == 0:
        return x

    # Lane width: large multiple of 128 -> unmasked, full-vreg stores.
    lanes = max(_LANE, (lanes // _LANE) * _LANE)

    # Rows needed to hold all elements, rounded to the (8,128) tile grid.
    rows = -(-n // lanes)
    block_rows = max(_SUBLANE, (block_rows // _SUBLANE) * _SUBLANE)
    block_rows = min(block_rows, -(-rows // _SUBLANE) * _SUBLANE)
    rows = -(-rows // block_rows) * block_rows           # exact grid coverage

    padded = rows * lanes
    flat = jnp.ravel(x)
    if padded != n:
        flat = jnp.pad(flat, (0, padded - n))
    x2d = flat.reshape(rows, lanes)

    grid = (rows // block_rows,)
    out = pl.pallas_call(
        _swish_kernel,
        out_shape=jax.ShapeDtypeStruct((rows, lanes), dtype),
        grid=grid,
        in_specs=[pl.BlockSpec((block_rows, lanes), lambda i: (i, 0))],
        out_specs=pl.BlockSpec((block_rows, lanes), lambda i: (i, 0)),
        compiler_params=pltpu.CompilerParams(
            dimension_semantics=("parallel",)),   # use both TCs on v7x
    )(x2d)

    return out.reshape(-1)[:n].reshape(orig_shape)


def swish_reference(x):
    return x * jax.nn.sigmoid(x)


if __name__ == "__main__":
    key = jax.random.PRNGKey(0)
    x = jax.random.normal(key, (2, 4, 16, 16), jnp.float32)

    out = swish(x)
    out = jax.block_until_ready(out)

    ref = swish_reference(x)
    assert out.shape == x.shape
    assert jnp.allclose(out, ref, atol=1e-5, rtol=1e-5), "mismatch vs reference"

    print("KERNEL_OK")
</pallas_src>

<mosaic_0001>
module attributes {stable_mosaic.version = 11 : i64} {
  func.func @_swish_kernel(%arg0: i32, %arg1: memref<8x512xf32, #tpu.memory_space<vmem>>, %arg2: memref<8x512xf32, #tpu.memory_space<vmem>>) attributes {dimension_semantics = [#tpu.dimension_semantics<parallel>], iteration_bounds = array<i64: 1>, scalar_prefetch = 0 : i64, scratch_operands = 0 : i64, tpu.core_type = #tpu.core_type<tc>, window_params = [{transform_indices = @transform_0, window_bounds = array<i64: 8, 512>}, {transform_indices = @transform_1, window_bounds = array<i64: 8, 512>}]} {
    %c0 = arith.constant 0 : index
    %c0_0 = arith.constant 0 : index
    %0 = vector.load %arg1[%c0, %c0_0] : memref<8x512xf32, #tpu.memory_space<vmem>>, vector<8x512xf32>
    %cst = arith.constant 5.000000e-01 : f32
    %1 = vector.broadcast %cst : f32 to vector<8x512xf32>
    %2 = arith.mulf %1, %0 : vector<8x512xf32>
    %3 = math.tanh %2 : vector<8x512xf32>
    %cst_1 = arith.constant 1.000000e+00 : f32
    %4 = vector.broadcast %cst_1 : f32 to vector<8x512xf32>
    %5 = arith.addf %3, %4 : vector<8x512xf32>
    %cst_2 = arith.constant 5.000000e-01 : f32
    %6 = vector.broadcast %cst_2 : f32 to vector<8x512xf32>
    %7 = arith.mulf %6, %5 : vector<8x512xf32>
    %8 = arith.mulf %0, %7 : vector<8x512xf32>
    %c0_3 = arith.constant 0 : index
    %c0_4 = arith.constant 0 : index
    %9 = vector.load %arg2[%c0_3, %c0_4] : memref<8x512xf32, #tpu.memory_space<vmem>>, vector<8x512xf32>
    tpu.vector_store %arg2[%c0_3, %c0_4], %8 {strides = array<i32>} : memref<8x512xf32, #tpu.memory_space<vmem>>, vector<8x512xf32>,
    return
  }
  func.func @transform_0(%arg0: i32) -> (i32, i32) {
    %c0_i32 = arith.constant 0 : i32
    %c0_i32_0 = arith.constant 0 : i32
    return %arg0, %c0_i32 : i32, i32
  }
  func.func @transform_1(%arg0: i32) -> (i32, i32) {
    %c0_i32 = arith.constant 0 : i32
    %c0_i32_0 = arith.constant 0 : i32
    return %arg0, %c0_i32 : i32, i32
  }
}

</mosaic_0001>

<llo_original>
// kernel: tpu_custom_call.1
$region0: #{tpu_custom_call.1}
  #allocation0 [shape = 'u32[]', space=smem, size = 0x4, offset = 0x4, fixed_abs, tag = 'smem constant byte address 0x4 - core index']
  #allocation1 [shape = 'u32[144,128]{1,0:T(1,128)}', space=vmem, size = 0x12000, scoped, tag = 'internal scratch']
  %s0 = inlined_call_operand.hbm [shape: f32[8,512], index: 0, kind: input, shape index: {}]
  %s1 = inlined_call_operand.hbm [shape: f32[8,512], index: 1, kind: output, shape index: {}]
  %s2 = sld [smem:[#allocation0]]
  $region18: #{tpu_custom_call.1} parent=0
    _
  %s4 = ssub.s32 1, %s2
  %s5 = scalar_select 0, %s4, %s2
  $region1: #{tpu_custom_call.1} parent=0
    #allocation2 [shape = 'u8[16384]{0}', space=vmem, size = 0x4000, scoped, tag = 'input window, operand 0, single buffered']
    #allocation3 [shape = 's32[1]{0}', space=sflag, size = 0x4, scoped, tag = 'scoped memory for tpu_custom_call.1']
    #allocation4 [shape = 's32[1]{0}', space=sflag, size = 0x4, scoped, tag = 'scoped memory for tpu_custom_call.1']
    #allocation5 [shape = 'u8[16384]{0}', space=vmem, size = 0x4000, scoped, tag = 'output window, operand 0, single buffered']
    %6 = vsyncpa [#allocation3], 0
    %7 = vsyncpa [#allocation4], 0
    // Predicated region
    $region2: #{tpu_custom_call.1} parent=1 // pred_check
      _
    $region3: #{tpu_custom_call.1} parent=1 // pred_check_branch
      %9 = sbr.rel (0) target = $region5
    $region4: #{tpu_custom_call.1} parent=1 // pred_region
      %s11 = ssub.s32 512, 512
      %12 = vsyncadd [#allocation3], %s11
      %s14 = sshll.u32 [#allocation2], 4
      %s15 = int_to_ptr.vmem [resolvable:$true] %s14
      %17 = dma.hbm_to_vmem [thread:$0]  %s0, 512, %s15, [#allocation3]
    $region5: #{tpu_custom_call.1} parent=1 // pred_fallthru
      _
    // Predicated region
    $region6: #{tpu_custom_call.1} parent=1 // pred_check
      _
    $region7: #{tpu_custom_call.1} parent=1 // pred_check_branch
      %19 = sbr.rel (0) target = $region9
    $region8: #{tpu_custom_call.1} parent=1 // pred_region
      %20 = dma.done [#allocation3], 512
    $region9: #{tpu_custom_call.1} parent=1 // pred_fallthru
      _
    %v21 = vld [vmem:[#allocation2] sm:$0xff]
    %v22 = vld [vmem:[#allocation2 + $0x8] sm:$0xff]
    %v23 = vld [vmem:[#allocation2 + $0x10] sm:$0xff]
    %v24 = vld [vmem:[#allocation2 + $0x18] sm:$0xff]
    %v25 = vmul.f32 %v21, 0.5
    %v26 = vmul.f32 %v22, 0.5
    %v27 = vmul.f32 %v23, 0.5
    %v28 = vmul.f32 %v24, 0.5
    %v29 = vtanh.pop %v25
    %v30 = vtanh.pop %v26
    %v31 = vtanh.pop %v27
    %v32 = vtanh.pop %v28
    %v33 = vadd.f32 %v29, 1.0
    %v34 = vadd.f32 %v30, 1.0
    %v35 = vadd.f32 %v31, 1.0
    %v36 = vadd.f32 %v32, 1.0
    %v37 = vmul.f32 %v33, 0.5
    %v38 = vmul.f32 %v34, 0.5
    %v39 = vmul.f32 %v35, 0.5
    %v40 = vmul.f32 %v36, 0.5
    %v41 = vmul.f32 %v21, %v37
    %v42 = vmul.f32 %v22, %v38
    %v43 = vmul.f32 %v23, %v39
    %v44 = vmul.f32 %v24, %v40
    %45 = vst [vmem:[#allocation5] sm:$0xff] %v41
    %46 = vst [vmem:[#allocation5 + $0x8] sm:$0xff] %v42
    %47 = vst [vmem:[#allocation5 + $0x10] sm:$0xff] %v43
    %48 = vst [vmem:[#allocation5 + $0x18] sm:$0xff] %v44
    // Predicated region
    $region10: #{tpu_custom_call.1} parent=1 // pred_check
      _
    $region11: #{tpu_custom_call.1} parent=1 // pred_check_branch
      %50 = sbr.rel (0) target = $region13
    $region12: #{tpu_custom_call.1} parent=1 // pred_region
      %s52 = ssub.s32 512, 512
      %53 = vsyncadd [#allocation4], %s52
      %s55 = sshll.u32 [#allocation5], 4
      %s56 = int_to_ptr.vmem [resolvable:$true] %s55
      %58 = dma.vmem_to_hbm [thread:$0]  %s56, 512, %s1, [#allocation4]
    $region13: #{tpu_custom_call.1} parent=1 // pred_fallthru
      _
    // Predicated region
    $region14: #{tpu_custom_call.1} parent=1 // pred_check
      _
    $region15: #{tpu_custom_call.1} parent=1 // pred_check_branch
      %60 = sbr.rel (0) target = $region17
    $region16: #{tpu_custom_call.1} parent=1 // pred_region
      %61 = dma.done [#allocation4], 512
    $region17: #{tpu_custom_call.1} parent=1 // pred_fallthru
      _
    %62 = vsyncpa [#allocation3], 1
    %63 = vsyncpa [#allocation4], 1

</llo_original>
